<compile_context>
chip_gen: v5e
topology: v5e:2x2
jax: 0.10.0
libtpu: 0.0.40
codegen_flags: <defaults>
</compile_context>

<pallas_src>
import math

import jax
import jax.numpy as jnp
from jax import lax
from jax.experimental import pallas as pl
from jax.experimental.pallas import tpu as pltpu


def padding_expression(kernel_size: int, stride: int, dilation: int = 1) -> int:
    p = (dilation * (kernel_size - 1) - stride + 1) / 2
    return max(int(math.ceil(p)), 0)


def _round_up(v: int, m: int) -> int:
    return (v + m - 1) // m * m


def _tile_bytes(rows: int, cols: int, itemsize: int) -> int:
    # VMEM footprint of a 2-D slab after (8, 128) vreg tiling.
    return _round_up(max(rows, 1), 8) * _round_up(max(cols, 1), 128) * itemsize


def _vmem_capacity_bytes() -> int:
    try:
        return int(pltpu.get_tpu_info().vmem_capacity_bytes)
    except Exception:
        return 64 * 1024 * 1024  # v7x per-core VMEM; safe lower bound


def _split3_bf16(v):
    """Split an f32 array into 3 bf16 terms whose f32 sum reconstructs v to
    ~2^-24 relative error.  The selection matmuls below then run as exact
    bf16 x bf16 -> f32 MXU ops, independent of f32-matmul precision defaults."""
    parts = []
    for _ in range(3):
        p = v.astype(jnp.bfloat16)
        parts.append(p)
        v = v - p.astype(jnp.float32)
    return parts


# ----------------------------------------------------------------------------
# Kernel: in-kernel padding + separable max/avg reduction (+ fused stride)
# ----------------------------------------------------------------------------
def _make_pool_kernel(H, W, pad, KH, KW, stride, OH, OW, pool_type,
                      compute_dtype, pad_value, use_scratch, fuse_stride):
    is_avg = pool_type == "avg"
    Hp, Wp = H + 2 * pad, W + 2 * pad
    OH1, OW1 = Hp - KH + 1, Wp - KW + 1
    comb = jnp.add if is_avg else jnp.maximum

    def compute(x):
        # x: (bp, Hp, Wp) in compute_dtype, padding already applied.
        bp = x.shape[0]

        # Separable reduction: KW lane-offset combines then KH sublane-offset
        # combines (KH+KW VPU ops per element instead of KH*KW).
        row = x[:, :, 0:OW1]
        for kw in range(1, KW):
            row = comb(row, x[:, :, kw:kw + OW1])
        acc = row[:, 0:OH1, :]
        for kh in range(1, KH):
            acc = comb(acc, row[:, kh:kh + OH1, :])

        if fuse_stride and stride > 1:
            # In-kernel stride-s subsample: only (OH, OW) ever reaches HBM.
            # Lane/sublane compaction is expressed as 0/1 selection matmuls on
            # the otherwise-idle MXU (exact via the bf16 split above).
            s = stride
            selw = (lax.broadcasted_iota(jnp.int32, (OW1, OW), 0)
                    == s * lax.broadcasted_iota(jnp.int32, (OW1, OW), 1)
                    ).astype(jnp.bfloat16)
            selh = (lax.broadcasted_iota(jnp.int32, (OH, OH1), 1)
                    == s * lax.broadcasted_iota(jnp.int32, (OH, OH1), 0)
                    ).astype(jnp.bfloat16)
            selw_b = jnp.broadcast_to(selw, (bp, OW1, OW))
            selh_b = jnp.broadcast_to(selh, (bp, OH, OH1))

            accf = acc.astype(jnp.float32)
            rw = sum(jnp.einsum("bhw,bwo->bho", p, selw_b,
                                preferred_element_type=jnp.float32)
                     for p in _split3_bf16(accf))
            acc = sum(jnp.einsum("boh,bhw->bow", selh_b, p,
                                 preferred_element_type=jnp.float32)
                      for p in _split3_bf16(rw))

        if is_avg:
            acc = acc.astype(jnp.float32) * (1.0 / (KH * KW))
        return acc

    if use_scratch:
        def kernel(x_ref, o_ref, pad_ref):
            # Padding fused into the kernel: fill the VMEM scratch with the
            # pad value, copy the unpadded interior, reduce from the scratch.
            pad_ref[...] = jnp.full(pad_ref.shape, pad_value, pad_ref.dtype)
            pad_ref[:, pad:pad + H, pad:pad + W] = (
                x_ref[...].astype(pad_ref.dtype))
            o_ref[...] = compute(pad_ref[...]).astype(o_ref.dtype)
    else:
        def kernel(x_ref, o_ref):
            o_ref[...] = compute(
                x_ref[...].astype(compute_dtype)).astype(o_ref.dtype)

    return kernel


# ----------------------------------------------------------------------------
# VMEM-aware plane-block selection
# ----------------------------------------------------------------------------
def _choose_plane_block(P, H, W, pad, KH, KW, stride, OH, OW,
                        in_itemsize, compute_itemsize, fuse_stride):
    Hp, Wp = H + 2 * pad, W + 2 * pad
    OH1, OW1 = Hp - KH + 1, Wp - KW + 1
    fused = fuse_stride and stride > 1
    out_r, out_c = (OH, OW) if fused else (OH1, OW1)

    cap = _vmem_capacity_bytes()
    # ~1/3 of the per-core VMEM (128 MiB on v5e/v6e, 64 MiB on v7x) leaves room
    # for pipeline slack and compiler temporaries.
    budget = min(cap // 3, 48 * 1024 * 1024)

    per = 0
    per += 2 * _tile_bytes(H, W, in_itemsize)            # input block, x2 buffers
    per += 2 * _tile_bytes(out_r, out_c, in_itemsize)    # output block, x2 buffers
    per += _tile_bytes(Hp, Wp, compute_itemsize)         # padded scratch / upcast
    per += _tile_bytes(Hp, OW1, compute_itemsize)        # `row` intermediate
    per += _tile_bytes(OH1, OW1, compute_itemsize)       # `acc` intermediate
    if fused:
        per += 3 * (_tile_bytes(OH1, OW1, 2) + _tile_bytes(OH1, OW, 2))  # bf16 splits
        per += _tile_bytes(OW1, OW, 2) + _tile_bytes(OH, OH1, 2)         # selectors
        per += _tile_bytes(OH1, OW, 4) + _tile_bytes(OH, OW, 4)          # matmul outs

    bp = max(1, budget // max(per, 1))
    if P >= 2:
        bp = min(bp, P // 2)      # keep >= 2 grid steps (v7x 2-TC sharding)
    bp = max(1, min(bp, P))
    while P % bp:                 # exact divisor -> no plane-axis padding pass
        bp -= 1

    vmem_limit = int(min(cap * 4 // 5, 100 * 1024 * 1024))
    return bp, vmem_limit


def _pallas_pool_planes(planes, KH, KW, stride, pad, OH, OW, pool_type,
                        fuse_stride):
    """planes: (P, H, W) unpadded -> pooled planes.

    fuse_stride=True  : output (P, OH, OW)   (stride applied in-kernel)
    fuse_stride=False : output (P, OH1, OW1) (stride-1 map; caller subsamples)
    """
    P, H, W = planes.shape
    Hp, Wp = H + 2 * pad, W + 2 * pad
    OH1, OW1 = Hp - KH + 1, Wp - KW + 1
    is_avg = pool_type == "avg"
    in_dtype = planes.dtype
    compute_dtype = jnp.float32 if is_avg else in_dtype

    if is_avg:
        pad_value = 0  # AvgPool2d count_include_pad=True
    elif jnp.issubdtype(in_dtype, jnp.floating):
        pad_value = float(jnp.finfo(in_dtype).min)  # behaves like -inf padding
    else:
        pad_value = int(jnp.iinfo(in_dtype).min)

    fused = fuse_stride and stride > 1
    out_r, out_c = (OH, OW) if fused else (OH1, OW1)

    bp, vmem_limit = _choose_plane_block(
        P, H, W, pad, KH, KW, stride, OH, OW,
        in_dtype.itemsize, jnp.dtype(compute_dtype).itemsize, fuse_stride)

    use_scratch = pad > 0
    scratch_shapes = ([pltpu.VMEM((bp, Hp, Wp), compute_dtype)]
                      if use_scratch else [])

    kernel = _make_pool_kernel(H, W, pad, KH, KW, stride, OH, OW, pool_type,
                               compute_dtype, pad_value, use_scratch,
                               fuse_stride)

    return pl.pallas_call(
        kernel,
        out_shape=jax.ShapeDtypeStruct((P, out_r, out_c), in_dtype),
        grid_spec=pltpu.PrefetchScalarGridSpec(
            num_scalar_prefetch=0,
            grid=(P // bp,),
            in_specs=[pl.BlockSpec((bp, H, W), lambda i: (i, 0, 0))],
            out_specs=pl.BlockSpec((bp, out_r, out_c), lambda i: (i, 0, 0)),
            scratch_shapes=scratch_shapes,
        ),
        compiler_params=pltpu.CompilerParams(
            dimension_semantics=("parallel",),  # shards planes across v7x TCs
            vmem_limit_bytes=vmem_limit,
        ),
    )(planes)


# ----------------------------------------------------------------------------
# Pooling module equivalent (forward pass)
# ----------------------------------------------------------------------------
def pooling_forward(x, *, kernel_size, stride, pool_type="max"):
    """x: (N, C, H, W) NCHW; pool_type in {'max', 'avg'} (the module's Choice)."""
    assert pool_type in ("max", "avg")
    N, C, H, W = x.shape
    KH = KW = int(kernel_size)
    s = int(stride)
    pad = padding_expression(kernel_size, stride)
    OH = (H + 2 * pad - KH) // s + 1
    OW = (W + 2 * pad - KW) // s + 1

    planes = x.reshape(N * C, H, W)  # free reshape (leading dims only)

    if s > 1:
        try:
            out = _pallas_pool_planes(planes, KH, KW, s, pad, OH, OW,
                                      pool_type, fuse_stride=True)
            return out.reshape(N, C, OH, OW)
        except Exception:
            # Defensive: if the fused-stride path fails to lower on this
            # backend, fall back to the stride-1 kernel + XLA subsample.
            pass

    out1 = _pallas_pool_planes(planes, KH, KW, s, pad, OH, OW, pool_type,
                               fuse_stride=False)
    if s > 1:
        out1 = out1[:, ::s, ::s][:, :OH, :OW]
    return out1.reshape(N, C, OH, OW)


if __name__ == "__main__":
    # Small shapes consistent with the module: NCHW = (2, 4, 16, 16).
    N, C, H, W = 2, 4, 16, 16
    key = jax.random.PRNGKey(0)
    x = jax.random.normal(key, (N, C, H, W), dtype=jnp.float32)

    def torch_like_ref(x, k, s, pool_type):
        pad = padding_expression(k, s)
        if pool_type == "max":
            init, op = -jnp.inf, lax.max
        else:
            init, op = 0.0, lax.add
        r = lax.reduce_window(
            x, init, op,
            window_dimensions=(1, 1, k, k),
            window_strides=(1, 1, s, s),
            padding=((0, 0), (0, 0), (pad, pad), (pad, pad)),
        )
        if pool_type == "avg":
            r = r / (k * k)  # count_include_pad=True (PyTorch default)
        return r

    configs = [
        ("max", 3, 1),
        ("avg", 3, 1),
        ("max", 3, 2),
        ("avg", 3, 2),
        ("max", 2, 2),
        ("avg", 2, 2),
    ]
    for pool_type, k, s in configs:
        out = pooling_forward(x, kernel_size=k, stride=s, pool_type=pool_type)
        out = jax.block_until_ready(out)
        ref = torch_like_ref(x, k, s, pool_type)
        assert out.shape == ref.shape, (pool_type, k, s, out.shape, ref.shape)
        assert jnp.allclose(out, ref, atol=1e-5, rtol=1e-5), (pool_type, k, s)

    print("KERNEL_OK")
</pallas_src>

<mosaic_0001>
module attributes {stable_mosaic.version = 11 : i64} {
  func.func @kernel(%arg0: i32, %arg1: memref<4x16x16xf32, #tpu.memory_space<vmem>>, %arg2: memref<4x16x16xf32, #tpu.memory_space<vmem>>, %arg3: memref<4x18x18xf32, #tpu.memory_space<vmem>>) attributes {dimension_semantics = [#tpu.dimension_semantics<parallel>], iteration_bounds = array<i64: 2>, scalar_prefetch = 0 : i64, scratch_operands = 1 : i64, tpu.core_type = #tpu.core_type<tc>, window_params = [{transform_indices = @transform_0, window_bounds = array<i64: 4, 16, 16>}, {transform_indices = @transform_1, window_bounds = array<i64: 4, 16, 16>}]} {
    %cst = arith.constant -3.40282347E+38 : f32
    %0 = vector.broadcast %cst : f32 to vector<4x18x18xf32>
    %c0 = arith.constant 0 : index
    %c0_0 = arith.constant 0 : index
    %c0_1 = arith.constant 0 : index
    %1 = vector.load %arg3[%c0, %c0_0, %c0_1] : memref<4x18x18xf32, #tpu.memory_space<vmem>>, vector<4x18x18xf32>
    tpu.vector_store %arg3[%c0, %c0_0, %c0_1], %0 {strides = array<i32>} : memref<4x18x18xf32, #tpu.memory_space<vmem>>, vector<4x18x18xf32>,
    %c0_2 = arith.constant 0 : index
    %c0_3 = arith.constant 0 : index
    %c0_4 = arith.constant 0 : index
    %2 = vector.load %arg1[%c0_2, %c0_3, %c0_4] : memref<4x16x16xf32, #tpu.memory_space<vmem>>, vector<4x16x16xf32>
    %c0_5 = arith.constant 0 : index
    %c1 = arith.constant 1 : index
    %c1_6 = arith.constant 1 : index
    %3 = vector.load %arg3[%c0_5, %c1, %c1_6] : memref<4x18x18xf32, #tpu.memory_space<vmem>>, vector<4x16x16xf32>
    tpu.vector_store %arg3[%c0_5, %c1, %c1_6], %2 {strides = array<i32>} : memref<4x18x18xf32, #tpu.memory_space<vmem>>, vector<4x16x16xf32>,
    %c0_7 = arith.constant 0 : index
    %c0_8 = arith.constant 0 : index
    %c0_9 = arith.constant 0 : index
    %4 = vector.load %arg3[%c0_7, %c0_8, %c0_9] : memref<4x18x18xf32, #tpu.memory_space<vmem>>, vector<4x18x18xf32>
    %5 = vector.extract_strided_slice %4 {offsets = [0, 0, 0], sizes = [4, 18, 16], strides = [1, 1, 1]} : vector<4x18x18xf32> to vector<4x18x16xf32>
    %6 = vector.extract_strided_slice %4 {offsets = [0, 0, 1], sizes = [4, 18, 16], strides = [1, 1, 1]} : vector<4x18x18xf32> to vector<4x18x16xf32>
    %7 = arith.maximumf %5, %6 : vector<4x18x16xf32>
    %8 = vector.extract_strided_slice %4 {offsets = [0, 0, 2], sizes = [4, 18, 16], strides = [1, 1, 1]} : vector<4x18x18xf32> to vector<4x18x16xf32>
    %9 = arith.maximumf %7, %8 : vector<4x18x16xf32>
    %10 = vector.extract_strided_slice %9 {offsets = [0, 0, 0], sizes = [4, 16, 16], strides = [1, 1, 1]} : vector<4x18x16xf32> to vector<4x16x16xf32>
    %11 = vector.extract_strided_slice %9 {offsets = [0, 1, 0], sizes = [4, 16, 16], strides = [1, 1, 1]} : vector<4x18x16xf32> to vector<4x16x16xf32>
    %12 = arith.maximumf %10, %11 : vector<4x16x16xf32>
    %13 = vector.extract_strided_slice %9 {offsets = [0, 2, 0], sizes = [4, 16, 16], strides = [1, 1, 1]} : vector<4x18x16xf32> to vector<4x16x16xf32>
    %14 = arith.maximumf %12, %13 : vector<4x16x16xf32>
    %c0_10 = arith.constant 0 : index
    %c0_11 = arith.constant 0 : index
    %c0_12 = arith.constant 0 : index
    %15 = vector.load %arg2[%c0_10, %c0_11, %c0_12] : memref<4x16x16xf32, #tpu.memory_space<vmem>>, vector<4x16x16xf32>
    tpu.vector_store %arg2[%c0_10, %c0_11, %c0_12], %14 {strides = array<i32>} : memref<4x16x16xf32, #tpu.memory_space<vmem>>, vector<4x16x16xf32>,
    return
  }
  func.func @transform_0(%arg0: i32) -> (i32, i32, i32) {
    %c0_i32 = arith.constant 0 : i32
    %c0_i32_0 = arith.constant 0 : i32
    %c0_i32_1 = arith.constant 0 : i32
    return %arg0, %c0_i32, %c0_i32_0 : i32, i32, i32
  }
  func.func @transform_1(%arg0: i32) -> (i32, i32, i32) {
    %c0_i32 = arith.constant 0 : i32
    %c0_i32_0 = arith.constant 0 : i32
    %c0_i32_1 = arith.constant 0 : i32
    return %arg0, %c0_i32, %c0_i32_0 : i32, i32, i32
  }
}

</mosaic_0001>

<llo_original>
// kernel: tpu_custom_call.1
$region0: #{tpu_custom_call.1}
  #allocation0 [shape = 'u32[]', space=smem, size = 0x4, offset = 0x4, fixed_abs, tag = 'smem constant byte address 0x4 - core index']
  #allocation1 [shape = 'u32[72,128]{1,0:T(1,128)}', space=vmem, size = 0x9000, scoped, tag = 'internal scratch']
  #allocation2 [shape = 'f32[4,18,18]{2,1,0:T(8,128)}', space=vmem, size = 0xc000, scoped, tag = 'scratch operand']
  %s0 = inlined_call_operand.hbm [shape: f32[8,16,16], index: 0, kind: input, shape index: {}]
  %s1 = inlined_call_operand.hbm [shape: f32[8,16,16], index: 1, kind: output, shape index: {}]
  %s2 = sld [smem:[#allocation0]]
  $region41: #{tpu_custom_call.1} parent=0
    _
  %s4 = ssub.s32 1, %s2
  %s5 = scalar_select 0, %s4, %s2
  $region1: #{tpu_custom_call.1} parent=0
    #allocation3 [shape = 'u8[65536]{0}', space=vmem, size = 0x10000, scoped, tag = 'input window, operand 0']
    #allocation4 [shape = 's32[2]{0}', space=sflag, size = 0x8, scoped, tag = 'scoped memory for tpu_custom_call.1']
    #allocation5 [shape = 's32[2]{0}', space=sflag, size = 0x8, scoped, tag = 'scoped memory for tpu_custom_call.1']
    #allocation6 [shape = 'u8[65536]{0}', space=vmem, size = 0x10000, scoped, tag = 'output window, operand 0']
    %6 = vsyncpa [#allocation4], 0
    %s7 = scalar_lea.sflag [#allocation4], 1
    %8 = vsyncpa %s7, 0
    %9 = vsyncpa [#allocation5], 0
    %s10 = scalar_lea.sflag [#allocation5], 1
    %11 = vsyncpa %s10, 0
    loop: start=0, step=1, limit=4
    $region2: #{tpu_custom_call.1} parent=1 // loop_pre_header
      _
    $region3: #{tpu_custom_call.1} parent=1 // loop_header
      %s13 = sphi 0, %s17
      %p14 = scmp.ge.s32.totalorder %s13, 4
      %s23 = sphi 0, %s25
      %s26 = sphi 0, %s23
      %s27 = sphi 0, %s26
      %s43 = sphi 0, %s27
      %s49 = sphi 0, %s51
      %s52 = sphi 0, %s49
      %s53 = sphi 0, %s52
      %s69 = sphi 0, %s53
    $region4: #{tpu_custom_call.1} parent=1 // loop_header_branch
      %16 = sbr.rel (%p14) target = $region8
    $region5: #{tpu_custom_call.1} parent=1 // loop_body
      %s18 = ssub.s32 %s13, 1
      %s19 = ssub.s32 %s13, 2
      %s20 = sadd.s32 %s13, 1
      %s21 = ssub.s32 %s13, %s20
      %p22 = scmp.eq.s32.totalorder %s21, 0
      %s24 = sadd.s32 %s23, 1
      %s25 = scalar_select %p22, %s23, %s24
      %p28 = pneg %p22
      %p29 = scmp.eq.s32.totalorder %s13, 1
      %p30 = por %p28, %p29
      %p31 = scmp.ne.s32.totalorder %s23, %s26
      %p32 = scmp.eq.s32.totalorder %s13, 0
      %p33 = por %p31, %p32
      %p34 = scmp.ne.s32.totalorder %s23, %s26
      %p35 = scmp.eq.s32.totalorder %s18, 1
      %p36 = por %p34, %p35
      %p37 = scmp.ne.s32.totalorder %s26, %s27
      %p38 = scmp.eq.s32.totalorder %s18, 0
      %p39 = por %p37, %p38
      %p40 = scmp.ne.s32.totalorder %s26, %s27
      %p41 = scmp.eq.s32.totalorder %s19, 1
      %p42 = por %p40, %p41
      %p44 = scmp.ne.s32.totalorder %s27, %s43
      %p45 = scmp.eq.s32.totalorder %s19, 0
      %p46 = por %p44, %p45
      %s47 = ssub.s32 %s13, %s20
      %p48 = scmp.eq.s32.totalorder %s47, 0
      %s50 = sadd.s32 %s49, 1
      %s51 = scalar_select %p48, %s49, %s50
      %p54 = pneg %p48
      %p55 = scmp.eq.s32.totalorder %s13, 1
      %p56 = por %p54, %p55
      %p57 = scmp.ne.s32.totalorder %s49, %s52
      %p58 = scmp.eq.s32.totalorder %s13, 0
      %p59 = por %p57, %p58
      %p60 = scmp.ne.s32.totalorder %s49, %s52
      %p61 = scmp.eq.s32.totalorder %s18, 1
      %p62 = por %p60, %p61
      %p63 = scmp.ne.s32.totalorder %s52, %s53
      %p64 = scmp.eq.s32.totalorder %s18, 0
      %p65 = por %p63, %p64
      %p66 = scmp.ne.s32.totalorder %s52, %s53
      %p67 = scmp.eq.s32.totalorder %s19, 1
      %p68 = por %p66, %p67
      %p70 = scmp.ne.s32.totalorder %s53, %s69
      %p71 = scmp.eq.s32.totalorder %s19, 0
      %p72 = por %p70, %p71
      %p73 = scmp.le.s32.totalorder 1, %s13
      %p74 = scmp.lt.s32.totalorder %s13, 3
      %p75 = pnand %p73, %p74
      %p76 = pneg %p75
      // Predicated region
      $region9: #{tpu_custom_call.1} parent=5 // pred_check
        _
      $region10: #{tpu_custom_call.1} parent=5 // pred_check_branch
        %78 = sbr.rel (%p75) target = $region12
      $region11: #{tpu_custom_call.1} parent=5 // pred_region
        %s79 = ssub.s32 %s13, 1
      $region12: #{tpu_custom_call.1} parent=5 // pred_fallthru
        _
      %p80 = scmp.lt.s32.totalorder %s13, 2
      // Predicated region
      $region13: #{tpu_custom_call.1} parent=5 // pred_check
        %p81 = pneg %p80
      $region14: #{tpu_custom_call.1} parent=5 // pred_check_branch
        %83 = sbr.rel (%p81) target = $region16
      $region15: #{tpu_custom_call.1} parent=5 // pred_region
        // Predicated region
        $region17: #{tpu_custom_call.1} parent=15 // pred_check
          %p84 = pneg %p33
        $region18: #{tpu_custom_call.1} parent=15 // pred_check_branch
          %86 = sbr.rel (%p84) target = $region20
        $region19: #{tpu_custom_call.1} parent=15 // pred_region
          %s87 = sand.u32 %s23, 1
          %s88 = scalar_lea.sflag [#allocation4], %s87
          %s89 = sand.u32 %s23, 1
          %s90 = smul.addr %s89, 64
          %s91 = scalar_lea.vmem [#allocation3], %s90
          %s92 = smul.u32 4, %s13
          %94 = vsyncadd %s88, 0
          %s95 = smul.addr %s92, 2
          %s96 = smul.addr %s95, 8
          %s97 = scalar_lea.hbm %s0, %s96
          %s98 = sshll.u32 %s97, 4
          %s99 = int_to_ptr.hbm [resolvable:$true] %s98
          %s100 = sshll.u32 %s91, 4
          %s101 = int_to_ptr.vmem [resolvable:$true] %s100
          %106 = dma.hbm_to_vmem [thread:$0]  %s99, 1024, %s101, %s88, 128, 128, 8
        $region20: #{tpu_custom_call.1} parent=15 // pred_fallthru
          _
      $region16: #{tpu_custom_call.1} parent=5 // pred_fallthru
        _
      %p107 = scmp.le.s32.totalorder 1, %s13
      %p108 = scmp.lt.s32.totalorder %s13, 3
      %p109 = pnand %p107, %p108
      %p110 = pneg %p109
      // Predicated region
      $region21: #{tpu_custom_call.1} parent=5 // pred_check
        _
      $region22: #{tpu_custom_call.1} parent=5 // pred_check_branch
        %112 = sbr.rel (%p109) target = $region24
      $region23: #{tpu_custom_call.1} parent=5 // pred_region
        %s113 = ssub.s32 %s13, 1
        %s114 = sand.u32 %s26, 1
        %s115 = scalar_lea.sflag [#allocation4], %s114
        %s116 = sand.u32 %s26, 1
        %s117 = smul.addr %s116, 64
        %s118 = scalar_lea.vmem [#allocation3], %s117
        // Predicated region
        $region25: #{tpu_custom_call.1} parent=23 // pred_check
          %p119 = pneg %p39
        $region26: #{tpu_custom_call.1} parent=23 // pred_check_branch
          %121 = sbr.rel (%p119) target = $region28
        $region27: #{tpu_custom_call.1} parent=23 // pred_region
          %123 = dma.done %s115, 1024
        $region28: #{tpu_custom_call.1} parent=23 // pred_fallthru
          _
        %s124 = sand.u32 %s26, 1
        %s125 = scalar_lea.sflag [#allocation4], %s124
        %s126 = sand.u32 %s26, 1
        %s127 = smul.addr %s126, 64
        %s128 = scalar_lea.vmem [#allocation3], %s127
        %p129 = pneg %p39
        %p130 = pneg %p36
        %p131 = pneg %p65
        %p132 = pneg %p62
        %s133 = sand.u32 %s52, 1
        %s134 = scalar_lea.sflag [#allocation5], %s133
        %s135 = sand.u32 %s52, 1
        %s136 = smul.addr %s135, 64
        %s137 = scalar_lea.vmem [#allocation6], %s136
        %s138 = smul.u32 4, %s18
        %s139 = smul.u32 4, %s18
        %vm140 = vcmask 146432
        %141 = vst.msk [vmem:[#allocation2] sm:$0xff] %vm140, -3.4028235e+38
        %142 = vst.msk [vmem:[#allocation2 + $0x8] sm:$0xff] %vm140, -3.4028235e+38
        %vm143 = vcmask 140288
        %144 = vst.msk [vmem:[#allocation2 + $0x10] sm:$0x3] %vm143, -3.4028235e+38
        %145 = vst.msk [vmem:[#allocation2 + $0x18] sm:$0xff] %vm140, -3.4028235e+38
        %146 = vst.msk [vmem:[#allocation2 + $0x20] sm:$0xff] %vm140, -3.4028235e+38
        %147 = vst.msk [vmem:[#allocation2 + $0x28] sm:$0x3] %vm143, -3.4028235e+38
        %148 = vst.msk [vmem:[#allocation2 + $0x30] sm:$0xff] %vm140, -3.4028235e+38
        %149 = vst.msk [vmem:[#allocation2 + $0x38] sm:$0xff] %vm140, -3.4028235e+38
        %150 = vst.msk [vmem:[#allocation2 + $0x40] sm:$0x3] %vm143, -3.4028235e+38
        %151 = vst.msk [vmem:[#allocation2 + $0x48] sm:$0xff] %vm140, -3.4028235e+38
        %152 = vst.msk [vmem:[#allocation2 + $0x50] sm:$0xff] %vm140, -3.4028235e+38
        %153 = vst.msk [vmem:[#allocation2 + $0x58] sm:$0x3] %vm143, -3.4028235e+38
        %v154 = vld [vmem:[%s118] sm:$0xff]
        %v155 = vld [vmem:[%s118 + $0x8] sm:$0xff]
        %v156 = vld [vmem:[%s118 + $0x10] sm:$0xff]
        %v157 = vld [vmem:[%s118 + $0x18] sm:$0xff]
        %v158 = vld [vmem:[%s118 + $0x20] sm:$0xff]
        %v159 = vld [vmem:[%s118 + $0x28] sm:$0xff]
        %v160 = vld [vmem:[%s118 + $0x30] sm:$0xff]
        %v161 = vld [vmem:[%s118 + $0x38] sm:$0xff]
        %170 = vrot.lane.b32.xlu0 %v154, 1
        %v171 = vpop.permute.xlu0 %170
        %172 = vrot.lane.b32.xlu0 %v155, 1
        %v173 = vpop.permute.xlu0 %172
        %174 = vrot.lane.b32.xlu0 %v156, 1
        %v175 = vpop.permute.xlu0 %174
        %176 = vrot.lane.b32.xlu0 %v157, 1
        %v177 = vpop.permute.xlu0 %176
        %178 = vrot.lane.b32.xlu0 %v158, 1
        %v179 = vpop.permute.xlu0 %178
        %180 = vrot.lane.b32.xlu0 %v159, 1
        %v181 = vpop.permute.xlu0 %180
        %182 = vrot.lane.b32.xlu0 %v160, 1
        %v183 = vpop.permute.xlu0 %182
        %184 = vrot.lane.b32.xlu0 %v161, 1
        %v185 = vpop.permute.xlu0 %184
        %vm194 = vcmask 138248
        %195 = vst.msk [vmem:[#allocation2 + $0x1] sm:$0xff] %vm194, %v171
        %196 = vst.msk [vmem:[#allocation2 + $0x9] sm:$0xff] %vm194, %v173
        %197 = vst.msk [vmem:[#allocation2 + $0x19] sm:$0xff] %vm194, %v175
        %198 = vst.msk [vmem:[#allocation2 + $0x21] sm:$0xff] %vm194, %v177
        %199 = vst.msk [vmem:[#allocation2 + $0x31] sm:$0xff] %vm194, %v179
        %200 = vst.msk [vmem:[#allocation2 + $0x39] sm:$0xff] %vm194, %v181
        %201 = vst.msk [vmem:[#allocation2 + $0x49] sm:$0xff] %vm194, %v183
        %202 = vst.msk [vmem:[#allocation2 + $0x51] sm:$0xff] %vm194, %v185
        %v203 = vld [vmem:[#allocation2] sm:$0xff]
        %v204 = vld [vmem:[#allocation2 + $0x8] sm:$0xff]
        %v205 = vld [vmem:[#allocation2 + $0x10] sm:$0x3]
        %v206 = vld [vmem:[#allocation2 + $0x18] sm:$0xff]
        %v207 = vld [vmem:[#allocation2 + $0x20] sm:$0xff]
        %v208 = vld [vmem:[#allocation2 + $0x28] sm:$0x3]
        %v209 = vld [vmem:[#allocation2 + $0x30] sm:$0xff]
        %v210 = vld [vmem:[#allocation2 + $0x38] sm:$0xff]
        %v211 = vld [vmem:[#allocation2 + $0x40] sm:$0x3]
        %v212 = vld [vmem:[#allocation2 + $0x48] sm:$0xff]
        %v213 = vld [vmem:[#allocation2 + $0x50] sm:$0xff]
        %v214 = vld [vmem:[#allocation2 + $0x58] sm:$0x3]
        %227 = vrot.lane.b32.xlu0 %v203, 127
        %v228 = vpop.permute.xlu0 %227
        %229 = vrot.lane.b32.xlu0 %v204, 127
        %v230 = vpop.permute.xlu0 %229
        %231 = vrot.lane.b32.xlu0 %v205, 127
        %v232 = vpop.permute.xlu0 %231
        %233 = vrot.lane.b32.xlu0 %v206, 127
        %v234 = vpop.permute.xlu0 %233
        %235 = vrot.lane.b32.xlu0 %v207, 127
        %v236 = vpop.permute.xlu0 %235
        %237 = vrot.lane.b32.xlu0 %v208, 127
        %v238 = vpop.permute.xlu0 %237
        %239 = vrot.lane.b32.xlu0 %v209, 127
        %v240 = vpop.permute.xlu0 %239
        %241 = vrot.lane.b32.xlu0 %v210, 127
        %v242 = vpop.permute.xlu0 %241
        %243 = vrot.lane.b32.xlu0 %v211, 127
        %v244 = vpop.permute.xlu0 %243
        %245 = vrot.lane.b32.xlu0 %v212, 127
        %v246 = vpop.permute.xlu0 %245
        %247 = vrot.lane.b32.xlu0 %v213, 127
        %v248 = vpop.permute.xlu0 %247
        %249 = vrot.lane.b32.xlu0 %v214, 127
        %v250 = vpop.permute.xlu0 %249
        %v263 = vmax.f32 %v203, %v228
        %v264 = vmax.f32 %v204, %v230
        %v265 = vmax.f32 %v205, %v232
        %v266 = vmax.f32 %v206, %v234
        %v267 = vmax.f32 %v207, %v236
        %v268 = vmax.f32 %v208, %v238
        %v269 = vmax.f32 %v209, %v240
        %v270 = vmax.f32 %v210, %v242
        %v271 = vmax.f32 %v211, %v244
        %v272 = vmax.f32 %v212, %v246
        %v273 = vmax.f32 %v213, %v248
        %v274 = vmax.f32 %v214, %v250
        %275 = vrot.lane.b32.xlu0 %v203, 126
        %v276 = vpop.permute.xlu0 %275
        %277 = vrot.lane.b32.xlu0 %v204, 126
        %v278 = vpop.permute.xlu0 %277
        %279 = vrot.lane.b32.xlu0 %v205, 126
        %v280 = vpop.permute.xlu0 %279
        %281 = vrot.lane.b32.xlu0 %v206, 126
        %v282 = vpop.permute.xlu0 %281
        %283 = vrot.lane.b32.xlu0 %v207, 126
        %v284 = vpop.permute.xlu0 %283
        %285 = vrot.lane.b32.xlu0 %v208, 126
        %v286 = vpop.permute.xlu0 %285
        %287 = vrot.lane.b32.xlu0 %v209, 126
        %v288 = vpop.permute.xlu0 %287
        %289 = vrot.lane.b32.xlu0 %v210, 126
        %v290 = vpop.permute.xlu0 %289
        %291 = vrot.lane.b32.xlu0 %v211, 126
        %v292 = vpop.permute.xlu0 %291
        %293 = vrot.lane.b32.xlu0 %v212, 126
        %v294 = vpop.permute.xlu0 %293
        %295 = vrot.lane.b32.xlu0 %v213, 126
        %v296 = vpop.permute.xlu0 %295
        %297 = vrot.lane.b32.xlu0 %v214, 126
        %v298 = vpop.permute.xlu0 %297
        %v311 = vmax.f32 %v263, %v276
        %v312 = vmax.f32 %v264, %v278
        %v313 = vmax.f32 %v265, %v280
        %v314 = vmax.f32 %v266, %v282
        %v315 = vmax.f32 %v267, %v284
        %v316 = vmax.f32 %v268, %v286
        %v317 = vmax.f32 %v269, %v288
        %v318 = vmax.f32 %v270, %v290
        %v319 = vmax.f32 %v271, %v292
        %v320 = vmax.f32 %v272, %v294
        %v321 = vmax.f32 %v273, %v296
        %v322 = vmax.f32 %v274, %v298
        %vm335 = vcmask 1046528
        %v336 = vrot.slane %v311, 1
        %v337 = vrot.slane %v312, 1
        %v338 = vsel %vm335, %v336, %v337
        %v339 = vrot.slane %v313, 1
        %v340 = vsel %vm335, %v337, %v339
        %v341 = vrot.slane %v314, 1
        %v342 = vrot.slane %v315, 1
        %v343 = vsel %vm335, %v341, %v342
        %v344 = vrot.slane %v316, 1
        %v345 = vsel %vm335, %v342, %v344
        %v346 = vrot.slane %v317, 1
        %v347 = vrot.slane %v318, 1
        %v348 = vsel %vm335, %v346, %v347
        %v349 = vrot.slane %v319, 1
        %v350 = vsel %vm335, %v347, %v349
        %v351 = vrot.slane %v320, 1
        %v352 = vrot.slane %v321, 1
        %v353 = vsel %vm335, %v351, %v352
        %v354 = vrot.slane %v322, 1
        %v355 = vsel %vm335, %v352, %v354
        %v364 = vmax.f32 %v311, %v338
        %v365 = vmax.f32 %v312, %v340
        %v366 = vmax.f32 %v314, %v343
        %v367 = vmax.f32 %v315, %v345
        %v368 = vmax.f32 %v317, %v348
        %v369 = vmax.f32 %v318, %v350
        %v370 = vmax.f32 %v320, %v353
        %v371 = vmax.f32 %v321, %v355
        %vm372 = vcmask 1045504
        %v373 = vrot.slane %v311, 2
        %v374 = vrot.slane %v312, 2
        %v375 = vsel %vm372, %v373, %v374
        %v376 = vrot.slane %v313, 2
        %v377 = vsel %vm372, %v374, %v376
        %v378 = vrot.slane %v314, 2
        %v379 = vrot.slane %v315, 2
        %v380 = vsel %vm372, %v378, %v379
        %v381 = vrot.slane %v316, 2
        %v382 = vsel %vm372, %v379, %v381
        %v383 = vrot.slane %v317, 2
        %v384 = vrot.slane %v318, 2
        %v385 = vsel %vm372, %v383, %v384
        %v386 = vrot.slane %v319, 2
        %v387 = vsel %vm372, %v384, %v386
        %v388 = vrot.slane %v320, 2
        %v389 = vrot.slane %v321, 2
        %v390 = vsel %vm372, %v388, %v389
        %v391 = vrot.slane %v322, 2
        %v392 = vsel %vm372, %v389, %v391
        %v401 = vmax.f32 %v364, %v375
        %v402 = vmax.f32 %v365, %v377
        %v403 = vmax.f32 %v366, %v380
        %v404 = vmax.f32 %v367, %v382
        %v405 = vmax.f32 %v368, %v385
        %v406 = vmax.f32 %v369, %v387
        %v407 = vmax.f32 %v370, %v390
        %v408 = vmax.f32 %v371, %v392
        %vm409 = vcmask 130048
        %410 = vst.msk [vmem:[%s137] sm:$0xff] %vm409, %v401
        %411 = vst.msk [vmem:[%s137 + $0x8] sm:$0xff] %vm409, %v402
        %412 = vst.msk [vmem:[%s137 + $0x10] sm:$0xff] %vm409, %v403
        %413 = vst.msk [vmem:[%s137 + $0x18] sm:$0xff] %vm409, %v404
        %414 = vst.msk [vmem:[%s137 + $0x20] sm:$0xff] %vm409, %v405
        %415 = vst.msk [vmem:[%s137 + $0x28] sm:$0xff] %vm409, %v406
        %416 = vst.msk [vmem:[%s137 + $0x30] sm:$0xff] %vm409, %v407
        %417 = vst.msk [vmem:[%s137 + $0x38] sm:$0xff] %vm409, %v408
        %s418 = sand.u32 %s52, 1
        %s419 = scalar_lea.sflag [#allocation5], %s418
        %s420 = sand.u32 %s52, 1
        %s421 = smul.addr %s420, 64
        %s422 = scalar_lea.vmem [#allocation6], %s421
        // Predicated region
        $region29: #{tpu_custom_call.1} parent=23 // pred_check
          %p423 = pneg %p62
        $region30: #{tpu_custom_call.1} parent=23 // pred_check_branch
          %425 = sbr.rel (%p423) target = $region32
        $region31: #{tpu_custom_call.1} parent=23 // pred_region
          %s426 = smul.u32 4, %s18
          %428 = vsyncadd %s419, 0
          %s429 = smul.addr %s426, 2
          %s430 = smul.addr %s429, 8
          %s431 = scalar_lea.hbm %s1, %s430
          %s432 = sshll.u32 %s422, 4
          %s433 = int_to_ptr.vmem [resolvable:$true] %s432
          %s434 = sshll.u32 %s431, 4
          %s435 = int_to_ptr.hbm [resolvable:$true] %s434
          %440 = dma.vmem_to_hbm [thread:$0]  %s433, 1024, %s435, %s419, 128, 128, 8
        $region32: #{tpu_custom_call.1} parent=23 // pred_fallthru
          _
      $region24: #{tpu_custom_call.1} parent=5 // pred_fallthru
        _
      %p441 = scmp.le.s32.totalorder 2, %s13
      // Predicated region
      $region33: #{tpu_custom_call.1} parent=5 // pred_check
        %p442 = pneg %p441
      $region34: #{tpu_custom_call.1} parent=5 // pred_check_branch
        %444 = sbr.rel (%p442) target = $region36
      $region35: #{tpu_custom_call.1} parent=5 // pred_region
        %s445 = ssub.s32 %s13, 2
        // Predicated region
        $region37: #{tpu_custom_call.1} parent=35 // pred_check
          %p446 = pneg %p68
        $region38: #{tpu_custom_call.1} parent=35 // pred_check_branch
          %448 = sbr.rel (%p446) target = $region40
        $region39: #{tpu_custom_call.1} parent=35 // pred_region
          %s449 = sand.u32 %s53, 1
          %s450 = scalar_lea.sflag [#allocation5], %s449
          %s451 = sand.u32 %s53, 1
          %s452 = smul.addr %s451, 64
          %s453 = scalar_lea.vmem [#allocation6], %s452
          %455 = dma.done %s450, 1024
        $region40: #{tpu_custom_call.1} parent=35 // pred_fallthru
          _
      $region36: #{tpu_custom_call.1} parent=5 // pred_fallthru
        _
    $region6: #{tpu_custom_call.1} parent=1 // loop_footer
      %s17 = sadd.s32 1, %s13
    $region7: #{tpu_custom_call.1} parent=1 // loop_footer_branch
      %12 = sbr.rel target = $region3
    $region8: #{tpu_custom_call.1} parent=1 // loop_exit
      _
    %456 = vsyncpa [#allocation4], 1
    %s457 = scalar_lea.sflag [#allocation4], 1
    %458 = vsyncpa %s457, 1
    %459 = vsyncpa [#allocation5], 1
    %s460 = scalar_lea.sflag [#allocation5], 1
    %461 = vsyncpa %s460, 1

</llo_original>
